<compile_context>
chip_gen: v7x
topology: tpu7x:2x2x1
jax: 0.10.0
libtpu: 0.0.40
codegen_flags: <defaults>
</compile_context>

<pallas_src>
import functools

import jax
import jax.numpy as jnp
from jax import lax
from jax.experimental import pallas as pl
from jax.experimental.pallas import tpu as pltpu

BN_EPS = 1e-5
LANE = 128
SUBLANE = 8


def _round_up(x, m):
    return (x + m - 1) // m * m


# ----------------------------------------------------------------------------
# Kernel
# ----------------------------------------------------------------------------
def _resnet_kernel(
    x_ref,        # (TM, DIP)        f32
    w_in_ref,     # (DIP, DP)        bf16 (or f32)
    head_ref,     # (8, DP)          f32   rows: [b_in, scale_out, shift_out, 0...]
    w1_ref,       # (nb, DP, HP)     bf16  (BN folded in)
    b1_ref,       # (nb, 1, HP)      f32   (BN folded in)
    w2_ref,       # (nb, HP, DP)     bf16
    b2_ref,       # (nb, 1, DP)      f32
    w_out_ref,    # (DP, OP)         bf16
    b_out_ref,    # (1, OP)          f32
    o_ref,        # (TM, OP)         f32
    *,
    n_blocks: int,
):
    mm_dtype = w_in_ref.dtype

    x = x_ref[...]
    hv = head_ref[...]
    b_in = hv[0:1, :]
    scale_o = hv[1:2, :]
    shift_o = hv[2:3, :]

    # input projection
    h = jnp.dot(x.astype(mm_dtype), w_in_ref[...],
                preferred_element_type=jnp.float32) + b_in

    # Residual blocks.  Eval-mode BatchNorm has been folded into (w1, b1), so a
    # block is just  h += linear2(relu(linear1(h))).
    # NOTE: n_blocks is small and static -> trace-time unrolled; switch to
    # lax.fori_loop with dynamic w1_ref[i] indexing if n_blocks grows large.
    for i in range(n_blocks):
        z = jnp.dot(h.astype(mm_dtype), w1_ref[i],
                    preferred_element_type=jnp.float32) + b1_ref[i]
        z = jnp.maximum(z, 0.0)
        # TODO(synk): dropout1/dropout2 are identity in eval mode; training-mode
        # dropout (and batch-statistics BN) are not implemented in-kernel.
        z = jnp.dot(z.astype(mm_dtype), w2_ref[i],
                    preferred_element_type=jnp.float32) + b2_ref[i]
        h = h + z

    # output head: (pre-folded) BatchNorm affine -> ReLU -> Linear
    z = jnp.maximum(h * scale_o + shift_o, 0.0)
    out = jnp.dot(z.astype(mm_dtype), w_out_ref[...],
                  preferred_element_type=jnp.float32) + b_out_ref[...]
    o_ref[...] = out.astype(o_ref.dtype)


# ----------------------------------------------------------------------------
# Parameter construction (PyTorch-equivalent raw params)
# ----------------------------------------------------------------------------
def make_params(key, *, d_in, d_out, n_blocks, d_block, d_hidden):
    """Deterministic synthetic parameters (weights stored as (in, out))."""
    ks = jax.random.split(key, 16)
    f32 = jnp.float32

    def lin(k, fan_in, fan_out):
        kw, kb = jax.random.split(k)
        bound = 1.0 / jnp.sqrt(fan_in)
        w = jax.random.uniform(kw, (fan_in, fan_out), f32, -bound, bound)
        b = jax.random.uniform(kb, (1, fan_out), f32, -bound, bound)
        return w, b

    w_in, b_in = lin(ks[0], d_in, d_block)

    bn_g = 1.0 + 0.1 * jax.random.normal(ks[1], (n_blocks, 1, d_block), f32)
    bn_b = 0.1 * jax.random.normal(ks[2], (n_blocks, 1, d_block), f32)
    bn_m = 0.1 * jax.random.normal(ks[3], (n_blocks, 1, d_block), f32)
    bn_v = 0.5 + jnp.abs(jax.random.normal(ks[4], (n_blocks, 1, d_block), f32))

    w1s, b1s, w2s, b2s = [], [], [], []
    for i in range(n_blocks):
        w1, b1 = lin(jax.random.fold_in(ks[5], i), d_block, d_hidden)
        w2, b2 = lin(jax.random.fold_in(ks[6], i), d_hidden, d_block)
        w1s.append(w1); b1s.append(b1); w2s.append(w2); b2s.append(b2)
    w1 = jnp.stack(w1s); b1 = jnp.stack(b1s)
    w2 = jnp.stack(w2s); b2 = jnp.stack(b2s)

    bno_g = 1.0 + 0.1 * jax.random.normal(ks[7], (1, d_block), f32)
    bno_b = 0.1 * jax.random.normal(ks[8], (1, d_block), f32)
    bno_m = 0.1 * jax.random.normal(ks[9], (1, d_block), f32)
    bno_v = 0.5 + jnp.abs(jax.random.normal(ks[10], (1, d_block), f32))

    w_out, b_out = lin(ks[11], d_block, d_out)

    return dict(
        w_in=w_in, b_in=b_in,
        bn_g=bn_g, bn_b=bn_b, bn_m=bn_m, bn_v=bn_v,
        w1=w1, b1=b1, w2=w2, b2=b2,
        bno_g=bno_g, bno_b=bno_b, bno_m=bno_m, bno_v=bno_v,
        w_out=w_out, b_out=b_out,
    )


# ----------------------------------------------------------------------------
# Inference-time parameter prep: fold BN, pad to lane width, pack, cast.
# ----------------------------------------------------------------------------
def prepare_params(params, *, n_blocks, mm_dtype=jnp.bfloat16):
    f32 = jnp.float32
    w_in = params["w_in"].astype(f32)
    d_in, d_block = w_in.shape
    d_hidden = params["w1"].shape[-1]
    d_out = params["w_out"].shape[-1]

    DIP = _round_up(d_in, LANE)
    DP = _round_up(d_block, LANE)
    HP = _round_up(d_hidden, LANE)
    OP = _round_up(d_out, LANE)

    # --- per-block BN folding:  BN(h) @ w1 + b1 == h @ (s*w1) + ((beta-m*s)@w1 + b1)
    s = params["bn_g"] * lax.rsqrt(params["bn_v"] + BN_EPS)           # (nb,1,d_block)
    shift = params["bn_b"] - params["bn_m"] * s                        # (nb,1,d_block)
    w1f = s.reshape(n_blocks, d_block, 1) * params["w1"]               # (nb,d_block,d_hidden)
    b1f = jnp.einsum("nij,njk->nik", shift, params["w1"]) + params["b1"]

    # --- output-head BN folded to a per-feature affine (ReLU blocks full fold)
    s_o = params["bno_g"] * lax.rsqrt(params["bno_v"] + BN_EPS)        # (1,d_block)
    shift_o = params["bno_b"] - params["bno_m"] * s_o                  # (1,d_block)

    # --- pad to lane-dense shapes (zero padding is exact: padded lanes stay 0)
    w_in_p = jnp.pad(w_in, ((0, DIP - d_in), (0, DP - d_block))).astype(mm_dtype)
    w1_p = jnp.pad(w1f, ((0, 0), (0, DP - d_block), (0, HP - d_hidden))).astype(mm_dtype)
    b1_p = jnp.pad(b1f, ((0, 0), (0, 0), (0, HP - d_hidden))).astype(f32)
    w2_p = jnp.pad(params["w2"], ((0, 0), (0, HP - d_hidden), (0, DP - d_block))).astype(mm_dtype)
    b2_p = jnp.pad(params["b2"], ((0, 0), (0, 0), (0, DP - d_block))).astype(f32)
    w_out_p = jnp.pad(params["w_out"], ((0, DP - d_block), (0, OP - d_out))).astype(mm_dtype)
    b_out_p = jnp.pad(params["b_out"], ((0, 0), (0, OP - d_out))).astype(f32)

    # --- pack the small per-feature vectors into one (8, DP) slab
    head = jnp.zeros((SUBLANE, DP), f32)
    head = head.at[0, :d_block].set(params["b_in"][0])
    head = head.at[1, :d_block].set(s_o[0])
    head = head.at[2, :d_block].set(shift_o[0])

    return dict(
        w_in=w_in_p, head=head,
        w1=w1_p, b1=b1_p, w2=w2_p, b2=b2_p,
        w_out=w_out_p, b_out=b_out_p,
        d_out=d_out,
    )


# ----------------------------------------------------------------------------
# Wrapper
# ----------------------------------------------------------------------------
def resnet_forward(x, prep, *, n_blocks, row_tile=256):
    N, d_in = x.shape
    DIP, DP = prep["w_in"].shape
    HP = prep["w1"].shape[-1]
    OP = prep["w_out"].shape[-1]
    d_out = prep["d_out"]
    nb = n_blocks

    TM = min(_round_up(N, SUBLANE), row_tile)
    N_pad = _round_up(N, TM)
    x_p = jnp.pad(x.astype(jnp.float32),
                  ((0, N_pad - N), (0, DIP - d_in)))

    rows = lambda i: (i, 0)        # row-tiled arrays
    const2 = lambda i: (0, 0)      # VMEM-resident weights (2-D)
    const3 = lambda i: (0, 0, 0)   # VMEM-resident weights (3-D, stacked blocks)

    in_specs = [
        pl.BlockSpec((TM, DIP), rows),          # x
        pl.BlockSpec((DIP, DP), const2),        # w_in
        pl.BlockSpec((SUBLANE, DP), const2),    # packed [b_in, scale_o, shift_o]
        pl.BlockSpec((nb, DP, HP), const3),     # w1 (BN folded)
        pl.BlockSpec((nb, 1, HP), const3),      # b1 (BN folded)
        pl.BlockSpec((nb, HP, DP), const3),     # w2
        pl.BlockSpec((nb, 1, DP), const3),      # b2
        pl.BlockSpec((DP, OP), const2),         # w_out
        pl.BlockSpec((1, OP), const2),          # b_out
    ]
    out_spec = pl.BlockSpec((TM, OP), rows)

    out = pl.pallas_call(
        functools.partial(_resnet_kernel, n_blocks=n_blocks),
        out_shape=jax.ShapeDtypeStruct((N_pad, OP), jnp.float32),
        grid=(N_pad // TM,),
        in_specs=in_specs,
        out_specs=out_spec,
        compiler_params=pltpu.CompilerParams(
            dimension_semantics=("parallel",)),
    )(x_p, prep["w_in"], prep["head"], prep["w1"], prep["b1"],
      prep["w2"], prep["b2"], prep["w_out"], prep["b_out"])

    return out[:N, :d_out]


# ----------------------------------------------------------------------------
# Pure-JAX reference (raw, unfolded, f32 params)
# ----------------------------------------------------------------------------
def resnet_reference(x, params, *, n_blocks):
    h = x @ params["w_in"] + params["b_in"]
    for i in range(n_blocks):
        scale = params["bn_g"][i] * lax.rsqrt(params["bn_v"][i] + BN_EPS)
        z = (h - params["bn_m"][i]) * scale + params["bn_b"][i]
        z = jnp.maximum(z @ params["w1"][i] + params["b1"][i], 0.0)
        z = z @ params["w2"][i] + params["b2"][i]
        h = h + z
    scale_o = params["bno_g"] * lax.rsqrt(params["bno_v"] + BN_EPS)
    z = jnp.maximum((h - params["bno_m"]) * scale_o + params["bno_b"], 0.0)
    return z @ params["w_out"] + params["b_out"]


if __name__ == "__main__":
    # Shapes consistent with the module constructor:
    # ResNet(d_in=16, d_out=8, n_blocks=2, d_block=32,
    #        d_hidden_multiplier=2.0 -> d_hidden=64, dropout1=0., dropout2=0.)
    N, d_in, d_block, d_hidden, d_out, n_blocks = 16, 16, 32, 64, 8, 2

    key = jax.random.PRNGKey(0)
    kx, kp = jax.random.split(key)
    x = jax.random.normal(kx, (N, d_in), jnp.float32)
    params = make_params(kp, d_in=d_in, d_out=d_out, n_blocks=n_blocks,
                         d_block=d_block, d_hidden=d_hidden)

    prep = prepare_params(params, n_blocks=n_blocks, mm_dtype=jnp.bfloat16)
    out = resnet_forward(x, prep, n_blocks=n_blocks)
    out = jax.block_until_ready(out)

    ref = resnet_reference(x, params, n_blocks=n_blocks)
    assert out.shape == (N, d_out)
    # bf16 MXU inputs (f32 accumulation) -> compare against the f32 reference
    # with a bf16-appropriate tolerance.
    assert jnp.allclose(out, ref, atol=2e-2, rtol=2e-2), float(
        jnp.max(jnp.abs(out - ref)))

    print("KERNEL_OK")
</pallas_src>

<mosaic_0001>
module attributes {stable_mosaic.version = 11 : i64} {
  func.func @_resnet_kernel(%arg0: i32, %arg1: memref<16x128xf32, #tpu.memory_space<vmem>>, %arg2: memref<128x128xbf16, #tpu.memory_space<vmem>>, %arg3: memref<8x128xf32, #tpu.memory_space<vmem>>, %arg4: memref<2x128x128xbf16, #tpu.memory_space<vmem>>, %arg5: memref<2x1x128xf32, #tpu.memory_space<vmem>>, %arg6: memref<2x128x128xbf16, #tpu.memory_space<vmem>>, %arg7: memref<2x1x128xf32, #tpu.memory_space<vmem>>, %arg8: memref<128x128xbf16, #tpu.memory_space<vmem>>, %arg9: memref<1x128xf32, #tpu.memory_space<vmem>>, %arg10: memref<16x128xf32, #tpu.memory_space<vmem>>) attributes {dimension_semantics = [#tpu.dimension_semantics<parallel>], iteration_bounds = array<i64: 1>, scalar_prefetch = 0 : i64, scratch_operands = 0 : i64, tpu.core_type = #tpu.core_type<tc>, window_params = [{transform_indices = @transform_0, window_bounds = array<i64: 16, 128>}, {pipeline_mode = #tpu.pipeline_mode<synchronous>, transform_indices = @transform_1, window_bounds = array<i64: 128, 128>}, {pipeline_mode = #tpu.pipeline_mode<synchronous>, transform_indices = @transform_2, window_bounds = array<i64: 8, 128>}, {pipeline_mode = #tpu.pipeline_mode<synchronous>, transform_indices = @transform_3, window_bounds = array<i64: 2, 128, 128>}, {pipeline_mode = #tpu.pipeline_mode<synchronous>, transform_indices = @transform_4, window_bounds = array<i64: 2, 1, 128>}, {pipeline_mode = #tpu.pipeline_mode<synchronous>, transform_indices = @transform_5, window_bounds = array<i64: 2, 128, 128>}, {pipeline_mode = #tpu.pipeline_mode<synchronous>, transform_indices = @transform_6, window_bounds = array<i64: 2, 1, 128>}, {pipeline_mode = #tpu.pipeline_mode<synchronous>, transform_indices = @transform_7, window_bounds = array<i64: 128, 128>}, {pipeline_mode = #tpu.pipeline_mode<synchronous>, transform_indices = @transform_8, window_bounds = array<i64: 1, 128>}, {transform_indices = @transform_9, window_bounds = array<i64: 16, 128>}]} {
    %c0 = arith.constant 0 : index
    %c0_0 = arith.constant 0 : index
    %0 = vector.load %arg1[%c0, %c0_0] : memref<16x128xf32, #tpu.memory_space<vmem>>, vector<16x128xf32>
    %c0_1 = arith.constant 0 : index
    %c0_2 = arith.constant 0 : index
    %1 = vector.load %arg3[%c0_1, %c0_2] : memref<8x128xf32, #tpu.memory_space<vmem>>, vector<8x128xf32>
    %2 = vector.extract_strided_slice %1 {offsets = [0, 0], sizes = [1, 128], strides = [1, 1]} : vector<8x128xf32> to vector<1x128xf32>
    %3 = vector.extract_strided_slice %1 {offsets = [1, 0], sizes = [1, 128], strides = [1, 1]} : vector<8x128xf32> to vector<1x128xf32>
    %4 = vector.extract_strided_slice %1 {offsets = [2, 0], sizes = [1, 128], strides = [1, 1]} : vector<8x128xf32> to vector<1x128xf32>
    %5 = arith.truncf %0 : vector<16x128xf32> to vector<16x128xbf16>
    %c0_3 = arith.constant 0 : index
    %c0_4 = arith.constant 0 : index
    %6 = vector.load %arg2[%c0_3, %c0_4] : memref<128x128xbf16, #tpu.memory_space<vmem>>, vector<128x128xbf16>
    %cst = arith.constant dense<0.000000e+00> : vector<16x128xf32>
    %7 = tpu.matmul %5, %6, %cst {dimension_numbers = #tpu.dot_dimension_numbers<[1], [0], [0], [1], [0, 0, 1, 1], [], []>} : vector<16x128xbf16>, vector<128x128xbf16>, vector<16x128xf32> -> vector<16x128xf32>
    %8 = vector.broadcast %2 : vector<1x128xf32> to vector<16x128xf32>
    %9 = arith.addf %7, %8 : vector<16x128xf32>
    %10 = arith.truncf %9 : vector<16x128xf32> to vector<16x128xbf16>
    %c0_5 = arith.constant 0 : index
    %c0_6 = arith.constant 0 : index
    %c0_7 = arith.constant 0 : index
    %11 = vector.load %arg4[%c0_5, %c0_6, %c0_7] : memref<2x128x128xbf16, #tpu.memory_space<vmem>>, vector<1x128x128xbf16>
    %12 = vector.shape_cast %11 : vector<1x128x128xbf16> to vector<128x128xbf16>
    %cst_8 = arith.constant dense<0.000000e+00> : vector<16x128xf32>
    %13 = tpu.matmul %10, %12, %cst_8 {dimension_numbers = #tpu.dot_dimension_numbers<[1], [0], [0], [1], [0, 0, 1, 1], [], []>} : vector<16x128xbf16>, vector<128x128xbf16>, vector<16x128xf32> -> vector<16x128xf32>
    %c0_9 = arith.constant 0 : index
    %c0_10 = arith.constant 0 : index
    %c0_11 = arith.constant 0 : index
    %14 = vector.load %arg5[%c0_9, %c0_10, %c0_11] : memref<2x1x128xf32, #tpu.memory_space<vmem>>, vector<1x1x128xf32>
    %15 = vector.shape_cast %14 : vector<1x1x128xf32> to vector<1x128xf32>
    %16 = vector.broadcast %15 : vector<1x128xf32> to vector<16x128xf32>
    %17 = arith.addf %13, %16 : vector<16x128xf32>
    %cst_12 = arith.constant 0.000000e+00 : f32
    %18 = vector.broadcast %cst_12 : f32 to vector<16x128xf32>
    %19 = arith.maximumf %17, %18 : vector<16x128xf32>
    %20 = arith.truncf %19 : vector<16x128xf32> to vector<16x128xbf16>
    %c0_13 = arith.constant 0 : index
    %c0_14 = arith.constant 0 : index
    %c0_15 = arith.constant 0 : index
    %21 = vector.load %arg6[%c0_13, %c0_14, %c0_15] : memref<2x128x128xbf16, #tpu.memory_space<vmem>>, vector<1x128x128xbf16>
    %22 = vector.shape_cast %21 : vector<1x128x128xbf16> to vector<128x128xbf16>
    %cst_16 = arith.constant dense<0.000000e+00> : vector<16x128xf32>
    %23 = tpu.matmul %20, %22, %cst_16 {dimension_numbers = #tpu.dot_dimension_numbers<[1], [0], [0], [1], [0, 0, 1, 1], [], []>} : vector<16x128xbf16>, vector<128x128xbf16>, vector<16x128xf32> -> vector<16x128xf32>
    %c0_17 = arith.constant 0 : index
    %c0_18 = arith.constant 0 : index
    %c0_19 = arith.constant 0 : index
    %24 = vector.load %arg7[%c0_17, %c0_18, %c0_19] : memref<2x1x128xf32, #tpu.memory_space<vmem>>, vector<1x1x128xf32>
    %25 = vector.shape_cast %24 : vector<1x1x128xf32> to vector<1x128xf32>
    %26 = vector.broadcast %25 : vector<1x128xf32> to vector<16x128xf32>
    %27 = arith.addf %23, %26 : vector<16x128xf32>
    %28 = arith.addf %9, %27 : vector<16x128xf32>
    %29 = arith.truncf %28 : vector<16x128xf32> to vector<16x128xbf16>
    %c1 = arith.constant 1 : index
    %c0_20 = arith.constant 0 : index
    %c0_21 = arith.constant 0 : index
    %30 = vector.load %arg4[%c1, %c0_20, %c0_21] : memref<2x128x128xbf16, #tpu.memory_space<vmem>>, vector<1x128x128xbf16>
    %31 = vector.shape_cast %30 : vector<1x128x128xbf16> to vector<128x128xbf16>
    %cst_22 = arith.constant dense<0.000000e+00> : vector<16x128xf32>
    %32 = tpu.matmul %29, %31, %cst_22 {dimension_numbers = #tpu.dot_dimension_numbers<[1], [0], [0], [1], [0, 0, 1, 1], [], []>} : vector<16x128xbf16>, vector<128x128xbf16>, vector<16x128xf32> -> vector<16x128xf32>
    %c1_23 = arith.constant 1 : index
    %c0_24 = arith.constant 0 : index
    %c0_25 = arith.constant 0 : index
    %33 = vector.load %arg5[%c1_23, %c0_24, %c0_25] : memref<2x1x128xf32, #tpu.memory_space<vmem>>, vector<1x1x128xf32>
    %34 = vector.shape_cast %33 : vector<1x1x128xf32> to vector<1x128xf32>
    %35 = vector.broadcast %34 : vector<1x128xf32> to vector<16x128xf32>
    %36 = arith.addf %32, %35 : vector<16x128xf32>
    %cst_26 = arith.constant 0.000000e+00 : f32
    %37 = vector.broadcast %cst_26 : f32 to vector<16x128xf32>
    %38 = arith.maximumf %36, %37 : vector<16x128xf32>
    %39 = arith.truncf %38 : vector<16x128xf32> to vector<16x128xbf16>
    %c1_27 = arith.constant 1 : index
    %c0_28 = arith.constant 0 : index
    %c0_29 = arith.constant 0 : index
    %40 = vector.load %arg6[%c1_27, %c0_28, %c0_29] : memref<2x128x128xbf16, #tpu.memory_space<vmem>>, vector<1x128x128xbf16>
    %41 = vector.shape_cast %40 : vector<1x128x128xbf16> to vector<128x128xbf16>
    %cst_30 = arith.constant dense<0.000000e+00> : vector<16x128xf32>
    %42 = tpu.matmul %39, %41, %cst_30 {dimension_numbers = #tpu.dot_dimension_numbers<[1], [0], [0], [1], [0, 0, 1, 1], [], []>} : vector<16x128xbf16>, vector<128x128xbf16>, vector<16x128xf32> -> vector<16x128xf32>
    %c1_31 = arith.constant 1 : index
    %c0_32 = arith.constant 0 : index
    %c0_33 = arith.constant 0 : index
    %43 = vector.load %arg7[%c1_31, %c0_32, %c0_33] : memref<2x1x128xf32, #tpu.memory_space<vmem>>, vector<1x1x128xf32>
    %44 = vector.shape_cast %43 : vector<1x1x128xf32> to vector<1x128xf32>
    %45 = vector.broadcast %44 : vector<1x128xf32> to vector<16x128xf32>
    %46 = arith.addf %42, %45 : vector<16x128xf32>
    %47 = arith.addf %28, %46 : vector<16x128xf32>
    %48 = vector.broadcast %3 : vector<1x128xf32> to vector<16x128xf32>
    %49 = arith.mulf %47, %48 : vector<16x128xf32>
    %50 = vector.broadcast %4 : vector<1x128xf32> to vector<16x128xf32>
    %51 = arith.addf %49, %50 : vector<16x128xf32>
    %cst_34 = arith.constant 0.000000e+00 : f32
    %52 = vector.broadcast %cst_34 : f32 to vector<16x128xf32>
    %53 = arith.maximumf %51, %52 : vector<16x128xf32>
    %54 = arith.truncf %53 : vector<16x128xf32> to vector<16x128xbf16>
    %c0_35 = arith.constant 0 : index
    %c0_36 = arith.constant 0 : index
    %55 = vector.load %arg8[%c0_35, %c0_36] : memref<128x128xbf16, #tpu.memory_space<vmem>>, vector<128x128xbf16>
    %cst_37 = arith.constant dense<0.000000e+00> : vector<16x128xf32>
    %56 = tpu.matmul %54, %55, %cst_37 {dimension_numbers = #tpu.dot_dimension_numbers<[1], [0], [0], [1], [0, 0, 1, 1], [], []>} : vector<16x128xbf16>, vector<128x128xbf16>, vector<16x128xf32> -> vector<16x128xf32>
    %c0_38 = arith.constant 0 : index
    %c0_39 = arith.constant 0 : index
    %57 = vector.load %arg9[%c0_38, %c0_39] : memref<1x128xf32, #tpu.memory_space<vmem>>, vector<1x128xf32>
    %58 = vector.broadcast %57 : vector<1x128xf32> to vector<16x128xf32>
    %59 = arith.addf %56, %58 : vector<16x128xf32>
    %c0_40 = arith.constant 0 : index
    %c0_41 = arith.constant 0 : index
    %60 = vector.load %arg10[%c0_40, %c0_41] : memref<16x128xf32, #tpu.memory_space<vmem>>, vector<16x128xf32>
    tpu.vector_store %arg10[%c0_40, %c0_41], %59 {strides = array<i32>} : memref<16x128xf32, #tpu.memory_space<vmem>>, vector<16x128xf32>,
    return
  }
  func.func @transform_0(%arg0: i32) -> (i32, i32) {
    %c0_i32 = arith.constant 0 : i32
    %c0_i32_0 = arith.constant 0 : i32
    return %arg0, %c0_i32 : i32, i32
  }
  func.func @transform_1(%arg0: i32) -> (i32, i32) {
    %c0_i32 = arith.constant 0 : i32
    %c0_i32_0 = arith.constant 0 : i32
    %c0_i32_1 = arith.constant 0 : i32
    return %c0_i32, %c0_i32_0 : i32, i32
  }
  func.func @transform_2(%arg0: i32) -> (i32, i32) {
    %c0_i32 = arith.constant 0 : i32
    %c0_i32_0 = arith.constant 0 : i32
    %c0_i32_1 = arith.constant 0 : i32
    return %c0_i32, %c0_i32_0 : i32, i32
  }
  func.func @transform_3(%arg0: i32) -> (i32, i32, i32) {
    %c0_i32 = arith.constant 0 : i32
    %c0_i32_0 = arith.constant 0 : i32
    %c0_i32_1 = arith.constant 0 : i32
    %c0_i32_2 = arith.constant 0 : i32
    return %c0_i32, %c0_i32_0, %c0_i32_1 : i32, i32, i32
  }
  func.func @transform_4(%arg0: i32) -> (i32, i32, i32) {
    %c0_i32 = arith.constant 0 : i32
    %c0_i32_0 = arith.constant 0 : i32
    %c0_i32_1 = arith.constant 0 : i32
    %c0_i32_2 = arith.constant 0 : i32
    return %c0_i32, %c0_i32_0, %c0_i32_1 : i32, i32, i32
  }
  func.func @transform_5(%arg0: i32) -> (i32, i32, i32) {
    %c0_i32 = arith.constant 0 : i32
    %c0_i32_0 = arith.constant 0 : i32
    %c0_i32_1 = arith.constant 0 : i32
    %c0_i32_2 = arith.constant 0 : i32
    return %c0_i32, %c0_i32_0, %c0_i32_1 : i32, i32, i32
  }
  func.func @transform_6(%arg0: i32) -> (i32, i32, i32) {
    %c0_i32 = arith.constant 0 : i32
    %c0_i32_0 = arith.constant 0 : i32
    %c0_i32_1 = arith.constant 0 : i32
    %c0_i32_2 = arith.constant 0 : i32
    return %c0_i32, %c0_i32_0, %c0_i32_1 : i32, i32, i32
  }
  func.func @transform_7(%arg0: i32) -> (i32, i32) {
    %c0_i32 = arith.constant 0 : i32
    %c0_i32_0 = arith.constant 0 : i32
    %c0_i32_1 = arith.constant 0 : i32
    return %c0_i32, %c0_i32_0 : i32, i32
  }
  func.func @transform_8(%arg0: i32) -> (i32, i32) {
    %c0_i32 = arith.constant 0 : i32
    %c0_i32_0 = arith.constant 0 : i32
    %c0_i32_1 = arith.constant 0 : i32
    return %c0_i32, %c0_i32_0 : i32, i32
  }
  func.func @transform_9(%arg0: i32) -> (i32, i32) {
    %c0_i32 = arith.constant 0 : i32
    %c0_i32_0 = arith.constant 0 : i32
    return %arg0, %c0_i32 : i32, i32
  }
}

</mosaic_0001>

<llo_original>
// kernel: tpu_custom_call.1
$region0: #{tpu_custom_call.1}
  #allocation0 [shape = 'u32[]', space=smem, size = 0x4, offset = 0x4, fixed_abs, tag = 'smem constant byte address 0x4 - core index']
  #allocation1 [shape = 'u32[144,128]{1,0:T(1,128)}', space=vmem, size = 0x12000, scoped, tag = 'internal scratch']
  %s0 = inlined_call_operand.hbm [shape: f32[16,128], index: 0, kind: input, shape index: {}]
  %s1 = inlined_call_operand.hbm [shape: bf16[128,128], index: 1, kind: input, shape index: {}]
  %s2 = inlined_call_operand.hbm [shape: f32[8,128], index: 2, kind: input, shape index: {}]
  %s3 = inlined_call_operand.hbm [shape: bf16[2,128,128], index: 3, kind: input, shape index: {}]
  %s4 = inlined_call_operand.vmem [shape: f32[2,1,128], index: 4, kind: input, shape index: {}]
  %s5 = inlined_call_operand.hbm [shape: bf16[2,128,128], index: 5, kind: input, shape index: {}]
  %s6 = inlined_call_operand.vmem [shape: f32[2,1,128], index: 6, kind: input, shape index: {}]
  %s7 = inlined_call_operand.hbm [shape: bf16[128,128], index: 7, kind: input, shape index: {}]
  %s8 = inlined_call_operand.vmem [shape: f32[1,128], index: 8, kind: input, shape index: {}]
  %s9 = inlined_call_operand.hbm [shape: f32[16,128], index: 9, kind: output, shape index: {}]
  %s10 = sld [smem:[#allocation0]]
  $region70: #{tpu_custom_call.1} parent=0
    _
  %s12 = ssub.s32 1, %s10
  %s13 = scalar_select 0, %s12, %s10
  $region1: #{tpu_custom_call.1} parent=0
    #allocation2 [shape = 'u8[8192]{0}', space=vmem, size = 0x2000, scoped, tag = 'input window, operand 0, single buffered']
    #allocation3 [shape = 's32[1]{0}', space=sflag, size = 0x4, scoped, tag = 'scoped memory for tpu_custom_call.1']
    #allocation4 [shape = 's32[1]{0}', space=sflag, size = 0x4, scoped, tag = 'scoped memory for tpu_custom_call.1']
    #allocation5 [shape = 'u8[32768]{0}', space=vmem, size = 0x8000, scoped, tag = 'input window, operand 1, single buffered']
    #allocation6 [shape = 's32[1]{0}', space=sflag, size = 0x4, scoped, tag = 'scoped memory for tpu_custom_call.1']
    #allocation7 [shape = 'u8[4096]{0}', space=vmem, size = 0x1000, scoped, tag = 'input window, operand 2, single buffered']
    #allocation8 [shape = 'u8[65536]{0}', space=vmem, size = 0x10000, scoped, tag = 'input window, operand 3, single buffered']
    #allocation9 [shape = 's32[1]{0}', space=sflag, size = 0x4, scoped, tag = 'scoped memory for tpu_custom_call.1']
    #allocation10 [shape = 'u8[65536]{0}', space=vmem, size = 0x10000, scoped, tag = 'input window, operand 5, single buffered']
    #allocation11 [shape = 'u8[32768]{0}', space=vmem, size = 0x8000, scoped, tag = 'input window, operand 7, single buffered']
    #allocation12 [shape = 's32[1]{0}', space=sflag, size = 0x4, scoped, tag = 'scoped memory for tpu_custom_call.1']
    #allocation13 [shape = 'u8[8192]{0}', space=vmem, size = 0x2000, scoped, tag = 'output window, operand 0, single buffered']
    %14 = vsyncpa [#allocation3], 0
    %15 = vsyncpa [#allocation6], 0
    %16 = vsyncpa [#allocation9], 0
    %17 = vsyncpa [#allocation12], 0
    %18 = vsyncpa [#allocation4], 0
    // Predicated region
    $region2: #{tpu_custom_call.1} parent=1 // pred_check
      _
    $region3: #{tpu_custom_call.1} parent=1 // pred_check_branch
      %20 = sbr.rel (0) target = $region5
    $region4: #{tpu_custom_call.1} parent=1 // pred_region
      %s22 = ssub.s32 256, 256
      %23 = vsyncadd [#allocation3], %s22
      %s24 = sshll.u32 [#allocation2], 4
      %s25 = int_to_ptr.vmem [resolvable:$true] %s24
      %30 = dma.hbm_to_vmem [thread:$0]  %s0, 256, %s25, [#allocation3], 128, 128, 8
    $region5: #{tpu_custom_call.1} parent=1 // pred_fallthru
      _
    // Predicated region
    $region6: #{tpu_custom_call.1} parent=1 // pred_check
      _
    $region7: #{tpu_custom_call.1} parent=1 // pred_check_branch
      %32 = sbr.rel (0) target = $region9
    $region8: #{tpu_custom_call.1} parent=1 // pred_region
      %s34 = ssub.s32 1024, 1024
      %35 = vsyncadd [#allocation6], %s34
      %s36 = sshll.u32 [#allocation5], 4
      %s37 = int_to_ptr.vmem [resolvable:$true] %s36
      %42 = dma.hbm_to_vmem [thread:$0]  %s1, 1024, %s37, [#allocation6], 64, 64, 4
    $region9: #{tpu_custom_call.1} parent=1 // pred_fallthru
      _
    // Predicated region
    $region10: #{tpu_custom_call.1} parent=1 // pred_check
      _
    $region11: #{tpu_custom_call.1} parent=1 // pred_check_branch
      %44 = sbr.rel (0) target = $region13
    $region12: #{tpu_custom_call.1} parent=1 // pred_region
      %s46 = ssub.s32 128, 128
      %47 = vsyncadd [#allocation6], %s46
      %s49 = sshll.u32 [#allocation7], 4
      %s50 = int_to_ptr.vmem [resolvable:$true] %s49
      %52 = dma.hbm_to_vmem [thread:$0]  %s2, 128, %s50, [#allocation6]
    $region13: #{tpu_custom_call.1} parent=1 // pred_fallthru
      _
    // Predicated region
    $region14: #{tpu_custom_call.1} parent=1 // pred_check
      _
    $region15: #{tpu_custom_call.1} parent=1 // pred_check_branch
      %54 = sbr.rel (0) target = $region17
    $region16: #{tpu_custom_call.1} parent=1 // pred_region
      %s56 = ssub.s32 2048, 2048
      %57 = vsyncadd [#allocation9], %s56
      %s58 = sshll.u32 [#allocation8], 4
      %s59 = int_to_ptr.vmem [resolvable:$true] %s58
      %64 = dma.hbm_to_vmem [thread:$0]  %s3, 2048, %s59, [#allocation9], 64, 64, 4
    $region17: #{tpu_custom_call.1} parent=1 // pred_fallthru
      _
    // Predicated region
    $region18: #{tpu_custom_call.1} parent=1 // pred_check
      _
    $region19: #{tpu_custom_call.1} parent=1 // pred_check_branch
      %66 = sbr.rel (0) target = $region21
    $region20: #{tpu_custom_call.1} parent=1 // pred_region
      _
    $region21: #{tpu_custom_call.1} parent=1 // pred_fallthru
      _
    // Predicated region
    $region22: #{tpu_custom_call.1} parent=1 // pred_check
      _
    $region23: #{tpu_custom_call.1} parent=1 // pred_check_branch
      %68 = sbr.rel (0) target = $region25
    $region24: #{tpu_custom_call.1} parent=1 // pred_region
      %s70 = ssub.s32 2048, 2048
      %71 = vsyncadd [#allocation9], %s70
      %s72 = sshll.u32 [#allocation10], 4
      %s73 = int_to_ptr.vmem [resolvable:$true] %s72
      %78 = dma.hbm_to_vmem [thread:$0]  %s5, 2048, %s73, [#allocation9], 64, 64, 4
    $region25: #{tpu_custom_call.1} parent=1 // pred_fallthru
      _
    // Predicated region
    $region26: #{tpu_custom_call.1} parent=1 // pred_check
      _
    $region27: #{tpu_custom_call.1} parent=1 // pred_check_branch
      %80 = sbr.rel (0) target = $region29
    $region28: #{tpu_custom_call.1} parent=1 // pred_region
      _
    $region29: #{tpu_custom_call.1} parent=1 // pred_fallthru
      _
    // Predicated region
    $region30: #{tpu_custom_call.1} parent=1 // pred_check
      _
    $region31: #{tpu_custom_call.1} parent=1 // pred_check_branch
      %82 = sbr.rel (0) target = $region33
    $region32: #{tpu_custom_call.1} parent=1 // pred_region
      %s84 = ssub.s32 1024, 1024
      %85 = vsyncadd [#allocation12], %s84
      %s86 = sshll.u32 [#allocation11], 4
      %s87 = int_to_ptr.vmem [resolvable:$true] %s86
      %92 = dma.hbm_to_vmem [thread:$0]  %s7, 1024, %s87, [#allocation12], 64, 64, 4
    $region33: #{tpu_custom_call.1} parent=1 // pred_fallthru
      _
    // Predicated region
    $region34: #{tpu_custom_call.1} parent=1 // pred_check
      _
    $region35: #{tpu_custom_call.1} parent=1 // pred_check_branch
      %94 = sbr.rel (0) target = $region37
    $region36: #{tpu_custom_call.1} parent=1 // pred_region
      _
    $region37: #{tpu_custom_call.1} parent=1 // pred_fallthru
      _
    // Predicated region
    $region38: #{tpu_custom_call.1} parent=1 // pred_check
      _
    $region39: #{tpu_custom_call.1} parent=1 // pred_check_branch
      %96 = sbr.rel (0) target = $region41
    $region40: #{tpu_custom_call.1} parent=1 // pred_region
      %97 = dma.done [#allocation3], 256
    $region41: #{tpu_custom_call.1} parent=1 // pred_fallthru
      _
    // Predicated region
    $region42: #{tpu_custom_call.1} parent=1 // pred_check
      _
    $region43: #{tpu_custom_call.1} parent=1 // pred_check_branch
      %99 = sbr.rel (0) target = $region45
    $region44: #{tpu_custom_call.1} parent=1 // pred_region
      %100 = dma.done [#allocation6], 1024
    $region45: #{tpu_custom_call.1} parent=1 // pred_fallthru
      _
    // Predicated region
    $region46: #{tpu_custom_call.1} parent=1 // pred_check
      _
    $region47: #{tpu_custom_call.1} parent=1 // pred_check_branch
      %102 = sbr.rel (0) target = $region49
    $region48: #{tpu_custom_call.1} parent=1 // pred_region
      %103 = dma.done [#allocation6], 128
    $region49: #{tpu_custom_call.1} parent=1 // pred_fallthru
      _
    // Predicated region
    $region50: #{tpu_custom_call.1} parent=1 // pred_check
      _
    $region51: #{tpu_custom_call.1} parent=1 // pred_check_branch
      %105 = sbr.rel (0) target = $region53
    $region52: #{tpu_custom_call.1} parent=1 // pred_region
      %106 = dma.done [#allocation9], 2048
    $region53: #{tpu_custom_call.1} parent=1 // pred_fallthru
      _
    // Predicated region
    $region54: #{tpu_custom_call.1} parent=1 // pred_check
      _
    $region55: #{tpu_custom_call.1} parent=1 // pred_check_branch
      %108 = sbr.rel (0) target = $region57
    $region56: #{tpu_custom_call.1} parent=1 // pred_region
      %109 = dma.done [#allocation9], 2048
    $region57: #{tpu_custom_call.1} parent=1 // pred_fallthru
      _
    // Predicated region
    $region58: #{tpu_custom_call.1} parent=1 // pred_check
      _
    $region59: #{tpu_custom_call.1} parent=1 // pred_check_branch
      %111 = sbr.rel (0) target = $region61
    $region60: #{tpu_custom_call.1} parent=1 // pred_region
      %112 = dma.done [#allocation12], 1024
    $region61: #{tpu_custom_call.1} parent=1 // pred_fallthru
      _
    %v114 = vld [vmem:[#allocation2] sm:$0xff]
    %v115 = vld [vmem:[#allocation2 + $0x8] sm:$0xff]
    %v116 = vld [vmem:[#allocation7] sm:$0xff]
    %v117 = vpack.c.bf16 %v115, %v114
    %v118 = vld [vmem:[#allocation5] sm:$0xf]
    %v119 = vld [vmem:[#allocation5 + $0x4] sm:$0xf]
    %v120 = vld [vmem:[#allocation5 + $0x8] sm:$0xf]
    %v121 = vld [vmem:[#allocation5 + $0xc] sm:$0xf]
    %v122 = vld [vmem:[#allocation5 + $0x10] sm:$0xf]
    %v123 = vld [vmem:[#allocation5 + $0x14] sm:$0xf]
    %v124 = vld [vmem:[#allocation5 + $0x18] sm:$0xf]
    %v125 = vld [vmem:[#allocation5 + $0x1c] sm:$0xf]
    %v126 = vld [vmem:[#allocation5 + $0x20] sm:$0xf]
    %v127 = vld [vmem:[#allocation5 + $0x24] sm:$0xf]
    %v128 = vld [vmem:[#allocation5 + $0x28] sm:$0xf]
    %v129 = vld [vmem:[#allocation5 + $0x2c] sm:$0xf]
    %v130 = vld [vmem:[#allocation5 + $0x30] sm:$0xf]
    %v131 = vld [vmem:[#allocation5 + $0x34] sm:$0xf]
    %v132 = vld [vmem:[#allocation5 + $0x38] sm:$0xf]
    %v133 = vld [vmem:[#allocation5 + $0x3c] sm:$0xf]
    %v134 = vlaneseq
    %v135 = vshrl.u32 %v134, 7
    %v136 = vsub.s32 0, %v135
    %v137 = vrot.slane %v116, %v136
    %v154 = vunpack.c.l.b16 %v118
    %v155 = vunpack.c.l.b16 %v119
    %v156 = vunpack.c.l.b16 %v120
    %v157 = vunpack.c.l.b16 %v121
    %v158 = vunpack.c.l.b16 %v122
    %v159 = vunpack.c.l.b16 %v123
    %v160 = vunpack.c.l.b16 %v124
    %v161 = vunpack.c.l.b16 %v125
    %v162 = vunpack.c.l.b16 %v126
    %v163 = vunpack.c.l.b16 %v127
    %v164 = vunpack.c.l.b16 %v128
    %v165 = vunpack.c.l.b16 %v129
    %v166 = vunpack.c.l.b16 %v130
    %v167 = vunpack.c.l.b16 %v131
    %v168 = vunpack.c.l.b16 %v132
    %v169 = vunpack.c.l.b16 %v133
    %v170 = vpack.c.b16 %v155, %v154
    %v171 = vpack.c.b16 %v157, %v156
    %v172 = vpack.c.b16 %v159, %v158
    %v173 = vpack.c.b16 %v161, %v160
    %v174 = vpack.c.b16 %v163, %v162
    %v175 = vpack.c.b16 %v165, %v164
    %v176 = vpack.c.b16 %v167, %v166
    %v177 = vpack.c.b16 %v169, %v168
    %186 = vmatprep.subr.bf16.mxu0 0
    %187 = vmatpush1.bf16.msra.mxu0 %v170
    %188 = vmatprep.subr.bf16.mxu0 0
    %189 = vmatpush1.bf16.msra.mxu0 %v171
    %190 = vmatprep.subr.bf16.mxu0 0
    %191 = vmatpush1.bf16.msra.mxu0 %v172
    %192 = vmatprep.subr.bf16.mxu0 0
    %193 = vmatpush1.bf16.msra.mxu0 %v173
    %194 = vmatprep.subr.bf16.mxu0 0
    %195 = vmatpush1.bf16.msra.mxu0 %v174
    %196 = vmatprep.subr.bf16.mxu0 0
    %197 = vmatpush1.bf16.msra.mxu0 %v175
    %198 = vmatprep.subr.bf16.mxu0 0
    %199 = vmatpush1.bf16.msra.mxu0 %v176
    %200 = vmatprep.subr.bf16.mxu0 0
    %201 = vmatpush1.bf16.msra.mxu0 %v177
    %202 = vmatprep.subr.bf16.mxu0 0
    %203 = vmatpush1.bf16.msra.mxu0 0
    %204 = vmatprep.subr.bf16.mxu0 0
    %205 = vmatpush1.bf16.msra.mxu0 0
    %206 = vmatprep.subr.bf16.mxu0 0
    %207 = vmatpush1.bf16.msra.mxu0 0
    %208 = vmatprep.subr.bf16.mxu0 0
    %209 = vmatpush1.bf16.msra.mxu0 0
    %210 = vmatprep.subr.bf16.mxu0 0
    %211 = vmatpush1.bf16.msra.mxu0 0
    %212 = vmatprep.subr.bf16.mxu0 0
    %213 = vmatpush1.bf16.msra.mxu0 0
    %214 = vmatprep.subr.bf16.mxu0 0
    %215 = vmatpush1.bf16.msra.mxu0 0
    %216 = vmatprep.subr.bf16.mxu0 0
    %217 = vmatpush1.bf16.msra.mxu0 0
    %218 = vmatprep.mubr.bf16.mxu0 0
    %219 = vmatmul.mubr.bf16.gmra.mrb[0].mxu0 %v117
    %v220 = vpop.f32.mrb[0].mxu0
    %v221 = vadd.f32 %v137, %v220
    %v222 = vpop.f32.mrb[0].mxu0
    %v223 = vpop.f32.mrb[0].mxu0
    %v224 = vadd.f32 %v137, %v223
    %v225 = vpop.f32.mrb[0].mxu0
    %226 = vdwg.mxu0
    %v227 = vpack.c.bf16 %v224, %v221
    %v228 = vld [vmem:[#allocation8] sm:$0xf]
    %v229 = vld [vmem:[#allocation8 + $0x4] sm:$0xf]
    %v230 = vld [vmem:[#allocation8 + $0x8] sm:$0xf]
    %v231 = vld [vmem:[#allocation8 + $0xc] sm:$0xf]
    %v232 = vld [vmem:[#allocation8 + $0x10] sm:$0xf]
    %v233 = vld [vmem:[#allocation8 + $0x14] sm:$0xf]
    %v234 = vld [vmem:[#allocation8 + $0x18] sm:$0xf]
    %v235 = vld [vmem:[#allocation8 + $0x1c] sm:$0xf]
    %v236 = vld [vmem:[#allocation8 + $0x20] sm:$0xf]
    %v237 = vld [vmem:[#allocation8 + $0x24] sm:$0xf]
    %v238 = vld [vmem:[#allocation8 + $0x28] sm:$0xf]
    %v239 = vld [vmem:[#allocation8 + $0x2c] sm:$0xf]
    %v240 = vld [vmem:[#allocation8 + $0x30] sm:$0xf]
    %v241 = vld [vmem:[#allocation8 + $0x34] sm:$0xf]
    %v242 = vld [vmem:[#allocation8 + $0x38] sm:$0xf]
    %v243 = vld [vmem:[#allocation8 + $0x3c] sm:$0xf]
    %v244 = vld [vmem:[%s4] sm:$0x1]
    %v246 = vlaneseq
    %v247 = vshrl.u32 %v246, 7
    %v248 = vsub.s32 0, %v247
    %v249 = vrot.slane %v244, %v248
    %v267 = vunpack.c.l.b16 %v228
    %v268 = vunpack.c.l.b16 %v229
    %v269 = vunpack.c.l.b16 %v230
    %v270 = vunpack.c.l.b16 %v231
    %v271 = vunpack.c.l.b16 %v232
    %v272 = vunpack.c.l.b16 %v233
    %v273 = vunpack.c.l.b16 %v234
    %v274 = vunpack.c.l.b16 %v235
    %v275 = vunpack.c.l.b16 %v236
    %v276 = vunpack.c.l.b16 %v237
    %v277 = vunpack.c.l.b16 %v238
    %v278 = vunpack.c.l.b16 %v239
    %v279 = vunpack.c.l.b16 %v240
    %v280 = vunpack.c.l.b16 %v241
    %v281 = vunpack.c.l.b16 %v242
    %v282 = vunpack.c.l.b16 %v243
    %v283 = vpack.c.b16 %v268, %v267
    %v284 = vpack.c.b16 %v270, %v269
    %v285 = vpack.c.b16 %v272, %v271
    %v286 = vpack.c.b16 %v274, %v273
    %v287 = vpack.c.b16 %v276, %v275
    %v288 = vpack.c.b16 %v278, %v277
    %v289 = vpack.c.b16 %v280, %v279
    %v290 = vpack.c.b16 %v282, %v281
    %299 = vmatprep.subr.bf16.mxu0 0
    %300 = vmatpush1.bf16.msra.mxu0 %v283
    %301 = vmatprep.subr.bf16.mxu0 0
    %302 = vmatpush1.bf16.msra.mxu0 %v284
    %303 = vmatprep.subr.bf16.mxu0 0
    %304 = vmatpush1.bf16.msra.mxu0 %v285
    %305 = vmatprep.subr.bf16.mxu0 0
    %306 = vmatpush1.bf16.msra.mxu0 %v286
    %307 = vmatprep.subr.bf16.mxu0 0
    %308 = vmatpush1.bf16.msra.mxu0 %v287
    %309 = vmatprep.subr.bf16.mxu0 0
    %310 = vmatpush1.bf16.msra.mxu0 %v288
    %311 = vmatprep.subr.bf16.mxu0 0
    %312 = vmatpush1.bf16.msra.mxu0 %v289
    %313 = vmatprep.subr.bf16.mxu0 0
    %314 = vmatpush1.bf16.msra.mxu0 %v290
    %315 = vmatprep.subr.bf16.mxu0 0
    %316 = vmatpush1.bf16.msra.mxu0 0
    %317 = vmatprep.subr.bf16.mxu0 0
    %318 = vmatpush1.bf16.msra.mxu0 0
    %319 = vmatprep.subr.bf16.mxu0 0
    %320 = vmatpush1.bf16.msra.mxu0 0
    %321 = vmatprep.subr.bf16.mxu0 0
    %322 = vmatpush1.bf16.msra.mxu0 0
    %323 = vmatprep.subr.bf16.mxu0 0
    %324 = vmatpush1.bf16.msra.mxu0 0
    %325 = vmatprep.subr.bf16.mxu0 0
    %326 = vmatpush1.bf16.msra.mxu0 0
    %327 = vmatprep.subr.bf16.mxu0 0
    %328 = vmatpush1.bf16.msra.mxu0 0
    %329 = vmatprep.subr.bf16.mxu0 0
    %330 = vmatpush1.bf16.msra.mxu0 0
    %331 = vmatprep.mubr.bf16.mxu0 0
    %332 = vmatmul.mubr.bf16.gmra.mrb[0].mxu0 %v227
    %v333 = vpop.f32.mrb[0].mxu0
    %v334 = vadd.f32 %v249, %v333
    %v335 = vpop.f32.mrb[0].mxu0
    %v336 = vpop.f32.mrb[0].mxu0
    %v337 = vadd.f32 %v249, %v336
    %v338 = vpop.f32.mrb[0].mxu0
    %339 = vdwg.mxu0
    %v340 = vmax.f32 %v334, 0.0
    %v341 = vmax.f32 %v337, 0.0
    %v342 = vpack.c.bf16 %v341, %v340
    %v343 = vld [vmem:[#allocation10] sm:$0xf]
    %v344 = vld [vmem:[#allocation10 + $0x4] sm:$0xf]
    %v345 = vld [vmem:[#allocation10 + $0x8] sm:$0xf]
    %v346 = vld [vmem:[#allocation10 + $0xc] sm:$0xf]
    %v347 = vld [vmem:[#allocation10 + $0x10] sm:$0xf]
    %v348 = vld [vmem:[#allocation10 + $0x14] sm:$0xf]
    %v349 = vld [vmem:[#allocation10 + $0x18] sm:$0xf]
    %v350 = vld [vmem:[#allocation10 + $0x1c] sm:$0xf]
    %v351 = vld [vmem:[#allocation10 + $0x20] sm:$0xf]
    %v352 = vld [vmem:[#allocation10 + $0x24] sm:$0xf]
    %v353 = vld [vmem:[#allocation10 + $0x28] sm:$0xf]
    %v354 = vld [vmem:[#allocation10 + $0x2c] sm:$0xf]
    %v355 = vld [vmem:[#allocation10 + $0x30] sm:$0xf]
    %v356 = vld [vmem:[#allocation10 + $0x34] sm:$0xf]
    %v357 = vld [vmem:[#allocation10 + $0x38] sm:$0xf]
    %v358 = vld [vmem:[#allocation10 + $0x3c] sm:$0xf]
    %v359 = vld [vmem:[%s6] sm:$0x1]
    %v361 = vlaneseq
    %v362 = vshrl.u32 %v361, 7
    %v363 = vsub.s32 0, %v362
    %v364 = vrot.slane %v359, %v363
    %v382 = vunpack.c.l.b16 %v343
    %v383 = vunpack.c.l.b16 %v344
    %v384 = vunpack.c.l.b16 %v345
    %v385 = vunpack.c.l.b16 %v346
    %v386 = vunpack.c.l.b16 %v347
    %v387 = vunpack.c.l.b16 %v348
    %v388 = vunpack.c.l.b16 %v349
    %v389 = vunpack.c.l.b16 %v350
    %v390 = vunpack.c.l.b16 %v351
    %v391 = vunpack.c.l.b16 %v352
    %v392 = vunpack.c.l.b16 %v353
    %v393 = vunpack.c.l.b16 %v354
    %v394 = vunpack.c.l.b16 %v355
    %v395 = vunpack.c.l.b16 %v356
    %v396 = vunpack.c.l.b16 %v357
    %v397 = vunpack.c.l.b16 %v358
    %v398 = vpack.c.b16 %v383, %v382
    %v399 = vpack.c.b16 %v385, %v384
    %v400 = vpack.c.b16 %v387, %v386
    %v401 = vpack.c.b16 %v389, %v388
    %v402 = vpack.c.b16 %v391, %v390
    %v403 = vpack.c.b16 %v393, %v392
    %v404 = vpack.c.b16 %v395, %v394
    %v405 = vpack.c.b16 %v397, %v396
    %414 = vmatprep.subr.bf16.mxu0 0
    %415 = vmatpush1.bf16.msra.mxu0 %v398
    %416 = vmatprep.subr.bf16.mxu0 0
    %417 = vmatpush1.bf16.msra.mxu0 %v399
    %418 = vmatprep.subr.bf16.mxu0 0
    %419 = vmatpush1.bf16.msra.mxu0 %v400
    %420 = vmatprep.subr.bf16.mxu0 0
    %421 = vmatpush1.bf16.msra.mxu0 %v401
    %422 = vmatprep.subr.bf16.mxu0 0
    %423 = vmatpush1.bf16.msra.mxu0 %v402
    %424 = vmatprep.subr.bf16.mxu0 0
    %425 = vmatpush1.bf16.msra.mxu0 %v403
    %426 = vmatprep.subr.bf16.mxu0 0
    %427 = vmatpush1.bf16.msra.mxu0 %v404
    %428 = vmatprep.subr.bf16.mxu0 0
    %429 = vmatpush1.bf16.msra.mxu0 %v405
    %430 = vmatprep.subr.bf16.mxu0 0
    %431 = vmatpush1.bf16.msra.mxu0 0
    %432 = vmatprep.subr.bf16.mxu0 0
    %433 = vmatpush1.bf16.msra.mxu0 0
    %434 = vmatprep.subr.bf16.mxu0 0
    %435 = vmatpush1.bf16.msra.mxu0 0
    %436 = vmatprep.subr.bf16.mxu0 0
    %437 = vmatpush1.bf16.msra.mxu0 0
    %438 = vmatprep.subr.bf16.mxu0 0
    %439 = vmatpush1.bf16.msra.mxu0 0
    %440 = vmatprep.subr.bf16.mxu0 0
    %441 = vmatpush1.bf16.msra.mxu0 0
    %442 = vmatprep.subr.bf16.mxu0 0
    %443 = vmatpush1.bf16.msra.mxu0 0
    %444 = vmatprep.subr.bf16.mxu0 0
    %445 = vmatpush1.bf16.msra.mxu0 0
    %446 = vmatprep.mubr.bf16.mxu0 0
    %447 = vmatmul.mubr.bf16.gmra.mrb[0].mxu0 %v342
    %v448 = vpop.f32.mrb[0].mxu0
    %v449 = vadd.f32 %v364, %v448
    %v450 = vpop.f32.mrb[0].mxu0
    %v451 = vpop.f32.mrb[0].mxu0
    %v452 = vadd.f32 %v364, %v451
    %v453 = vpop.f32.mrb[0].mxu0
    %454 = vdwg.mxu0
    %v455 = vadd.f32 %v221, %v449
    %v456 = vadd.f32 %v224, %v452
    %v457 = vpack.c.bf16 %v456, %v455
    %s458 = scalar_lea.vmem [#allocation8], 64
    %v459 = vld [vmem:[%s458] sm:$0xf]
    %v460 = vld [vmem:[%s458 + $0x4] sm:$0xf]
    %v461 = vld [vmem:[%s458 + $0x8] sm:$0xf]
    %v462 = vld [vmem:[%s458 + $0xc] sm:$0xf]
    %v463 = vld [vmem:[%s458 + $0x10] sm:$0xf]
    %v464 = vld [vmem:[%s458 + $0x14] sm:$0xf]
    %v465 = vld [vmem:[%s458 + $0x18] sm:$0xf]
    %v466 = vld [vmem:[%s458 + $0x1c] sm:$0xf]
    %v467 = vld [vmem:[%s458 + $0x20] sm:$0xf]
    %v468 = vld [vmem:[%s458 + $0x24] sm:$0xf]
    %v469 = vld [vmem:[%s458 + $0x28] sm:$0xf]
    %v470 = vld [vmem:[%s458 + $0x2c] sm:$0xf]
    %v471 = vld [vmem:[%s458 + $0x30] sm:$0xf]
    %v472 = vld [vmem:[%s458 + $0x34] sm:$0xf]
    %v473 = vld [vmem:[%s458 + $0x38] sm:$0xf]
    %v474 = vld [vmem:[%s458 + $0x3c] sm:$0xf]
    %s475 = scalar_lea.vmem %s4, 1
    %v476 = vld [vmem:[%s475] sm:$0x1]
    %v478 = vlaneseq
    %v479 = vshrl.u32 %v478, 7
    %v480 = vsub.s32 0, %v479
    %v481 = vrot.slane %v476, %v480
    %v499 = vunpack.c.l.b16 %v459
    %v500 = vunpack.c.l.b16 %v460
    %v501 = vunpack.c.l.b16 %v461
    %v502 = vunpack.c.l.b16 %v462
    %v503 = vunpack.c.l.b16 %v463
    %v504 = vunpack.c.l.b16 %v464
    %v505 = vunpack.c.l.b16 %v465
    %v506 = vunpack.c.l.b16 %v466
    %v507 = vunpack.c.l.b16 %v467
    %v508 = vunpack.c.l.b16 %v468
    %v509 = vunpack.c.l.b16 %v469
    %v510 = vunpack.c.l.b16 %v470
    %v511 = vunpack.c.l.b16 %v471
    %v512 = vunpack.c.l.b16 %v472
    %v513 = vunpack.c.l.b16 %v473
    %v514 = vunpack.c.l.b16 %v474
    %v515 = vpack.c.b16 %v500, %v499
    %v516 = vpack.c.b16 %v502, %v501
    %v517 = vpack.c.b16 %v504, %v503
    %v518 = vpack.c.b16 %v506, %v505
    %v519 = vpack.c.b16 %v508, %v507
    %v520 = vpack.c.b16 %v510, %v509
    %v521 = vpack.c.b16 %v512, %v511
    %v522 = vpack.c.b16 %v514, %v513
    %531 = vmatprep.subr.bf16.mxu0 0
    %532 = vmatpush1.bf16.msra.mxu0 %v515
    %533 = vmatprep.subr.bf16.mxu0 0
    %534 = vmatpush1.bf16.msra.mxu0 %v516
    %535 = vmatprep.subr.bf16.mxu0 0
    %536 = vmatpush1.bf16.msra.mxu0 %v517
    %537 = vmatprep.subr.bf16.mxu0 0
    %538 = vmatpush1.bf16.msra.mxu0 %v518
    %539 = vmatprep.subr.bf16.mxu0 0
    %540 = vmatpush1.bf16.msra.mxu0 %v519
    %541 = vmatprep.subr.bf16.mxu0 0
    %542 = vmatpush1.bf16.msra.mxu0 %v520
    %543 = vmatprep.subr.bf16.mxu0 0
    %544 = vmatpush1.bf16.msra.mxu0 %v521
    %545 = vmatprep.subr.bf16.mxu0 0
    %546 = vmatpush1.bf16.msra.mxu0 %v522
    %547 = vmatprep.subr.bf16.mxu0 0
    %548 = vmatpush1.bf16.msra.mxu0 0
    %549 = vmatprep.subr.bf16.mxu0 0
    %550 = vmatpush1.bf16.msra.mxu0 0
    %551 = vmatprep.subr.bf16.mxu0 0
    %552 = vmatpush1.bf16.msra.mxu0 0
    %553 = vmatprep.subr.bf16.mxu0 0
    %554 = vmatpush1.bf16.msra.mxu0 0
    %555 = vmatprep.subr.bf16.mxu0 0
    %556 = vmatpush1.bf16.msra.mxu0 0
    %557 = vmatprep.subr.bf16.mxu0 0
    %558 = vmatpush1.bf16.msra.mxu0 0
    %559 = vmatprep.subr.bf16.mxu0 0
    %560 = vmatpush1.bf16.msra.mxu0 0
    %561 = vmatprep.subr.bf16.mxu0 0
    %562 = vmatpush1.bf16.msra.mxu0 0
    %563 = vmatprep.mubr.bf16.mxu0 0
    %564 = vmatmul.mubr.bf16.gmra.mrb[0].mxu0 %v457
    %v565 = vpop.f32.mrb[0].mxu0
    %v566 = vadd.f32 %v481, %v565
    %v567 = vpop.f32.mrb[0].mxu0
    %v568 = vpop.f32.mrb[0].mxu0
    %v569 = vadd.f32 %v481, %v568
    %v570 = vpop.f32.mrb[0].mxu0
    %571 = vdwg.mxu0
    %v572 = vmax.f32 %v566, 0.0
    %v573 = vmax.f32 %v569, 0.0
    %v574 = vpack.c.bf16 %v573, %v572
    %s575 = scalar_lea.vmem [#allocation10], 64
    %v576 = vld [vmem:[%s575] sm:$0xf]
    %v577 = vld [vmem:[%s575 + $0x4] sm:$0xf]
    %v578 = vld [vmem:[%s575 + $0x8] sm:$0xf]
    %v579 = vld [vmem:[%s575 + $0xc] sm:$0xf]
    %v580 = vld [vmem:[%s575 + $0x10] sm:$0xf]
    %v581 = vld [vmem:[%s575 + $0x14] sm:$0xf]
    %v582 = vld [vmem:[%s575 + $0x18] sm:$0xf]
    %v583 = vld [vmem:[%s575 + $0x1c] sm:$0xf]
    %v584 = vld [vmem:[%s575 + $0x20] sm:$0xf]
    %v585 = vld [vmem:[%s575 + $0x24] sm:$0xf]
    %v586 = vld [vmem:[%s575 + $0x28] sm:$0xf]
    %v587 = vld [vmem:[%s575 + $0x2c] sm:$0xf]
    %v588 = vld [vmem:[%s575 + $0x30] sm:$0xf]
    %v589 = vld [vmem:[%s575 + $0x34] sm:$0xf]
    %v590 = vld [vmem:[%s575 + $0x38] sm:$0xf]
    %v591 = vld [vmem:[%s575 + $0x3c] sm:$0xf]
    %s592 = scalar_lea.vmem %s6, 1
    %v593 = vld [vmem:[%s592] sm:$0x1]
    %v595 = vlaneseq
    %v596 = vshrl.u32 %v595, 7
    %v597 = vsub.s32 0, %v596
    %v598 = vrot.slane %v593, %v597
    %v616 = vunpack.c.l.b16 %v576
    %v617 = vunpack.c.l.b16 %v577
    %v618 = vunpack.c.l.b16 %v578
    %v619 = vunpack.c.l.b16 %v579
    %v620 = vunpack.c.l.b16 %v580
    %v621 = vunpack.c.l.b16 %v581
    %v622 = vunpack.c.l.b16 %v582
    %v623 = vunpack.c.l.b16 %v583
    %v624 = vunpack.c.l.b16 %v584
    %v625 = vunpack.c.l.b16 %v585
    %v626 = vunpack.c.l.b16 %v586
    %v627 = vunpack.c.l.b16 %v587
    %v628 = vunpack.c.l.b16 %v588
    %v629 = vunpack.c.l.b16 %v589
    %v630 = vunpack.c.l.b16 %v590
    %v631 = vunpack.c.l.b16 %v591
    %v632 = vpack.c.b16 %v617, %v616
    %v633 = vpack.c.b16 %v619, %v618
    %v634 = vpack.c.b16 %v621, %v620
    %v635 = vpack.c.b16 %v623, %v622
    %v636 = vpack.c.b16 %v625, %v624
    %v637 = vpack.c.b16 %v627, %v626
    %v638 = vpack.c.b16 %v629, %v628
    %v639 = vpack.c.b16 %v631, %v630
    %648 = vmatprep.subr.bf16.mxu0 0
    %649 = vmatpush1.bf16.msra.mxu0 %v632
    %650 = vmatprep.subr.bf16.mxu0 0
    %651 = vmatpush1.bf16.msra.mxu0 %v633
    %652 = vmatprep.subr.bf16.mxu0 0
    %653 = vmatpush1.bf16.msra.mxu0 %v634
    %654 = vmatprep.subr.bf16.mxu0 0
    %655 = vmatpush1.bf16.msra.mxu0 %v635
    %656 = vmatprep.subr.bf16.mxu0 0
    %657 = vmatpush1.bf16.msra.mxu0 %v636
    %658 = vmatprep.subr.bf16.mxu0 0
    %659 = vmatpush1.bf16.msra.mxu0 %v637
    %660 = vmatprep.subr.bf16.mxu0 0
    %661 = vmatpush1.bf16.msra.mxu0 %v638
    %662 = vmatprep.subr.bf16.mxu0 0
    %663 = vmatpush1.bf16.msra.mxu0 %v639
    %664 = vmatprep.subr.bf16.mxu0 0
    %665 = vmatpush1.bf16.msra.mxu0 0
    %666 = vmatprep.subr.bf16.mxu0 0
    %667 = vmatpush1.bf16.msra.mxu0 0
    %668 = vmatprep.subr.bf16.mxu0 0
    %669 = vmatpush1.bf16.msra.mxu0 0
    %670 = vmatprep.subr.bf16.mxu0 0
    %671 = vmatpush1.bf16.msra.mxu0 0
    %672 = vmatprep.subr.bf16.mxu0 0
    %673 = vmatpush1.bf16.msra.mxu0 0
    %674 = vmatprep.subr.bf16.mxu0 0
    %675 = vmatpush1.bf16.msra.mxu0 0
    %676 = vmatprep.subr.bf16.mxu0 0
    %677 = vmatpush1.bf16.msra.mxu0 0
    %678 = vmatprep.subr.bf16.mxu0 0
    %679 = vmatpush1.bf16.msra.mxu0 0
    %680 = vmatprep.mubr.bf16.mxu0 0
    %681 = vmatmul.mubr.bf16.gmra.mrb[0].mxu0 %v574
    %v682 = vpop.f32.mrb[0].mxu0
    %v683 = vadd.f32 %v598, %v682
    %v684 = vpop.f32.mrb[0].mxu0
    %v685 = vpop.f32.mrb[0].mxu0
    %v686 = vadd.f32 %v598, %v685
    %v687 = vpop.f32.mrb[0].mxu0
    %688 = vdwg.mxu0
    %v689 = vadd.f32 %v455, %v683
    %v690 = vadd.f32 %v456, %v686
    %v691 = vlaneseq
    %v692 = vshrl.u32 %v691, 7
    %v693 = vsub.s32 1, %v692
    %v694 = vrot.slane %v116, %v693
    %v695 = vmul.f32 %v689, %v694
    %v696 = vmul.f32 %v690, %v694
    %v697 = vlaneseq
    %v698 = vshrl.u32 %v697, 7
    %v699 = vsub.s32 2, %v698
    %v700 = vrot.slane %v116, %v699
    %v701 = vadd.f32 %v695, %v700
    %v702 = vadd.f32 %v696, %v700
    %v703 = vmax.f32 %v701, 0.0
    %v704 = vmax.f32 %v702, 0.0
    %v705 = vpack.c.bf16 %v704, %v703
    %v706 = vld [vmem:[#allocation11] sm:$0xf]
    %v707 = vld [vmem:[#allocation11 + $0x4] sm:$0xf]
    %v708 = vld [vmem:[#allocation11 + $0x8] sm:$0xf]
    %v709 = vld [vmem:[#allocation11 + $0xc] sm:$0xf]
    %v710 = vld [vmem:[#allocation11 + $0x10] sm:$0xf]
    %v711 = vld [vmem:[#allocation11 + $0x14] sm:$0xf]
    %v712 = vld [vmem:[#allocation11 + $0x18] sm:$0xf]
    %v713 = vld [vmem:[#allocation11 + $0x1c] sm:$0xf]
    %v714 = vld [vmem:[#allocation11 + $0x20] sm:$0xf]
    %v715 = vld [vmem:[#allocation11 + $0x24] sm:$0xf]
    %v716 = vld [vmem:[#allocation11 + $0x28] sm:$0xf]
    %v717 = vld [vmem:[#allocation11 + $0x2c] sm:$0xf]
    %v718 = vld [vmem:[#allocation11 + $0x30] sm:$0xf]
    %v719 = vld [vmem:[#allocation11 + $0x34] sm:$0xf]
    %v720 = vld [vmem:[#allocation11 + $0x38] sm:$0xf]
    %v721 = vld [vmem:[#allocation11 + $0x3c] sm:$0xf]
    %v722 = vld [vmem:[%s8] sm:$0x1]
    %v724 = vlaneseq
    %v725 = vshrl.u32 %v724, 7
    %v726 = vsub.s32 0, %v725
    %v727 = vrot.slane %v722, %v726
    %v745 = vunpack.c.l.b16 %v706
    %v746 = vunpack.c.l.b16 %v707
    %v747 = vunpack.c.l.b16 %v708
    %v748 = vunpack.c.l.b16 %v709
    %v749 = vunpack.c.l.b16 %v710
    %v750 = vunpack.c.l.b16 %v711
    %v751 = vunpack.c.l.b16 %v712
    %v752 = vunpack.c.l.b16 %v713
    %v753 = vunpack.c.l.b16 %v714
    %v754 = vunpack.c.l.b16 %v715
    %v755 = vunpack.c.l.b16 %v716
    %v756 = vunpack.c.l.b16 %v717
    %v757 = vunpack.c.l.b16 %v718
    %v758 = vunpack.c.l.b16 %v719
    %v759 = vunpack.c.l.b16 %v720
    %v760 = vunpack.c.l.b16 %v721
    %v761 = vpack.c.b16 %v746, %v745
    %v762 = vpack.c.b16 %v748, %v747
    %v763 = vpack.c.b16 %v750, %v749
    %v764 = vpack.c.b16 %v752, %v751
    %v765 = vpack.c.b16 %v754, %v753
    %v766 = vpack.c.b16 %v756, %v755
    %v767 = vpack.c.b16 %v758, %v757
    %v768 = vpack.c.b16 %v760, %v759
    %777 = vmatprep.subr.bf16.mxu0 0
    %778 = vmatpush1.bf16.msra.mxu0 %v761
    %779 = vmatprep.subr.bf16.mxu0 0
    %780 = vmatpush1.bf16.msra.mxu0 %v762
    %781 = vmatprep.subr.bf16.mxu0 0
    %782 = vmatpush1.bf16.msra.mxu0 %v763
    %783 = vmatprep.subr.bf16.mxu0 0
    %784 = vmatpush1.bf16.msra.mxu0 %v764
    %785 = vmatprep.subr.bf16.mxu0 0
    %786 = vmatpush1.bf16.msra.mxu0 %v765
    %787 = vmatprep.subr.bf16.mxu0 0
    %788 = vmatpush1.bf16.msra.mxu0 %v766
    %789 = vmatprep.subr.bf16.mxu0 0
    %790 = vmatpush1.bf16.msra.mxu0 %v767
    %791 = vmatprep.subr.bf16.mxu0 0
    %792 = vmatpush1.bf16.msra.mxu0 %v768
    %793 = vmatprep.subr.bf16.mxu0 0
    %794 = vmatpush1.bf16.msra.mxu0 0
    %795 = vmatprep.subr.bf16.mxu0 0
    %796 = vmatpush1.bf16.msra.mxu0 0
    %797 = vmatprep.subr.bf16.mxu0 0
    %798 = vmatpush1.bf16.msra.mxu0 0
    %799 = vmatprep.subr.bf16.mxu0 0
    %800 = vmatpush1.bf16.msra.mxu0 0
    %801 = vmatprep.subr.bf16.mxu0 0
    %802 = vmatpush1.bf16.msra.mxu0 0
    %803 = vmatprep.subr.bf16.mxu0 0
    %804 = vmatpush1.bf16.msra.mxu0 0
    %805 = vmatprep.subr.bf16.mxu0 0
    %806 = vmatpush1.bf16.msra.mxu0 0
    %807 = vmatprep.subr.bf16.mxu0 0
    %808 = vmatpush1.bf16.msra.mxu0 0
    %809 = vmatprep.mubr.bf16.mxu0 0
    %810 = vmatmul.mubr.bf16.gmra.mrb[0].mxu0 %v705
    %v811 = vpop.f32.mrb[0].mxu0
    %v812 = vadd.f32 %v727, %v811
    %v813 = vpop.f32.mrb[0].mxu0
    %v814 = vpop.f32.mrb[0].mxu0
    %v815 = vadd.f32 %v727, %v814
    %v816 = vpop.f32.mrb[0].mxu0
    %817 = vdwg.mxu0
    %818 = vst [vmem:[#allocation13] sm:$0xff] %v812
    %819 = vst [vmem:[#allocation13 + $0x8] sm:$0xff] %v815
    // Predicated region
    $region62: #{tpu_custom_call.1} parent=1 // pred_check
      _
    $region63: #{tpu_custom_call.1} parent=1 // pred_check_branch
      %821 = sbr.rel (0) target = $region65
    $region64: #{tpu_custom_call.1} parent=1 // pred_region
      %s823 = ssub.s32 256, 256
      %824 = vsyncadd [#allocation4], %s823
      %s825 = sshll.u32 [#allocation13], 4
      %s826 = int_to_ptr.vmem [resolvable:$true] %s825
      %831 = dma.vmem_to_hbm [thread:$0]  %s826, 256, %s9, [#allocation4], 128, 128, 8
    $region65: #{tpu_custom_call.1} parent=1 // pred_fallthru
      _
    // Predicated region
    $region66: #{tpu_custom_call.1} parent=1 // pred_check
      _
    $region67: #{tpu_custom_call.1} parent=1 // pred_check_branch
      %833 = sbr.rel (0) target = $region69
    $region68: #{tpu_custom_call.1} parent=1 // pred_region
      %834 = dma.done [#allocation4], 256
    $region69: #{tpu_custom_call.1} parent=1 // pred_fallthru
      _
    %835 = vsyncpa [#allocation3], 1
    %836 = vsyncpa [#allocation6], 1
    %837 = vsyncpa [#allocation9], 1
    %838 = vsyncpa [#allocation12], 1
    %839 = vsyncpa [#allocation4], 1

</llo_original>
